<compile_context>
chip_gen: v6e
topology: v6e:2x2x1
jax: 0.10.0
libtpu: 0.0.40
codegen_flags: <defaults>
</compile_context>

<pallas_src>
import math
import functools

import jax
import jax.numpy as jnp
from jax.experimental import pallas as pl
from jax.experimental.pallas import tpu as pltpu


# ---------------------------------------------------------- fc0 preamble ----

def _fc0_kernel(x_ref, w_ref, b_ref, li_ref, h0_ref, *, alpha):
    """layer_inner = relu(x @ W + b);  h0_scaled = alpha * layer_inner."""
    h = jnp.dot(x_ref[...], w_ref[...], preferred_element_type=jnp.float32)
    h = jnp.maximum(h + b_ref[...], 0.0)
    li_ref[...] = h.astype(li_ref.dtype)     # bf16 MXU operand for the layers
    h0_ref[...] = alpha * h                  # f32 anchor, alpha pre-folded


def _fc0(x, fc_w, fc_b, *, alpha, compute_dtype):
    N = x.shape[0]
    H = fc_w.shape[1]
    return pl.pallas_call(
        functools.partial(_fc0_kernel, alpha=float(alpha)),
        out_shape=(jax.ShapeDtypeStruct((N, H), compute_dtype),   # layer_inner
                   jax.ShapeDtypeStruct((N, H), jnp.float32)),    # alpha * h0
    )(x, fc_w, fc_b)


# ------------------------------------------------------------ layer loop ----

def _gcnii_layers_kernel(omt_ref, adj_ref, li0_ref, h0_ref, w_ref,
                         o_ref, li_ref):
    """One grid step == one GCNII graph-conv layer.

    omt_ref : (L,)   f32 SMEM (scalar prefetch), 1 - theta_l
    adj_ref : (N, N) bf16, pre-scaled by (1 - alpha)    [single VMEM buffer]
    li0_ref : (N, H) bf16, relu(fc0(x))                 [single VMEM buffer]
    h0_ref  : (N, H) f32,  alpha * relu(fc0(x))         [single VMEM buffer]
    w_ref   : (H, H) bf16, theta_l * W_l (layer dim squeezed, pipelined)
    li_ref  : (N, H) bf16 VMEM scratch, carried layer_inner
    """
    l = pl.program_id(0)

    @pl.when(l == 0)
    def _():
        li_ref[...] = li0_ref[...]

    # hi_scaled = ((1 - alpha) * adj) @ layer_inner   (bf16 MXU, f32 acc)
    hi = jnp.dot(adj_ref[...], li_ref[...], preferred_element_type=jnp.float32)
    support = hi + h0_ref[...]                           # + alpha * h0  (f32)

    # theta*(support @ W) + (1 - theta)*support ; theta folded into w on host,
    # the identity path stays an f32 VPU add for accuracy at deep L.
    out = jnp.dot(support.astype(w_ref.dtype), w_ref[...],
                  preferred_element_type=jnp.float32)
    out = jnp.maximum(out + omt_ref[l] * support, 0.0)

    li_ref[...] = out.astype(li_ref.dtype)
    o_ref[...] = out           # VMEM store each step; HBM writeback once (end)


def gcnii_forward(x, adj, fc_w, fc_b, w_stack, thetas, *, alpha,
                  compute_dtype=jnp.bfloat16):
    """Fused GCNII forward.

    x: (N, F), adj: (N, N), fc_w: (F, H), fc_b: (H,), w_stack: (L, H, H),
    thetas: length-L sequence of theta_l = log(lamda / l + 1).
    """
    N, F = x.shape
    H = fc_w.shape[1]
    L = w_stack.shape[0]
    assert L >= 1, "need at least one GCNII layer"

    cdt = jnp.dtype(compute_dtype)
    elt = cdt.itemsize

    # ---- host-side folding (done once, amortized over all L layers) --------
    adj_c = ((1.0 - alpha) * adj).astype(cdt)                    # fold (1-alpha)
    thetas_f = jnp.asarray(thetas, jnp.float32)
    w_scaled = (thetas_f[:, None, None] * w_stack).astype(cdt)   # fold theta
    one_minus_theta = (1.0 - thetas_f)                           # per-layer scalar

    x_c = x.astype(cdt)
    fc_w_c = fc_w.astype(cdt)
    fc_b2 = fc_b.reshape(1, H).astype(jnp.float32)

    # ---- preamble: layer_inner = relu(fc0(x)), h0 = alpha * layer_inner -----
    li0, h0s = _fc0(x_c, fc_w_c, fc_b2, alpha=alpha, compute_dtype=cdt)

    # ---- generation-aware VMEM budget ---------------------------------------
    try:
        vmem_cap = int(pltpu.get_tpu_info().vmem_capacity_bytes)
    except Exception:
        vmem_cap = 64 * 1024 * 1024            # conservative fallback (v7x)
    vmem_budget = int(vmem_cap * 0.85)         # ~108 MiB v5e/v6e, ~54 MiB v7x

    vmem_need = (N * N * elt                   # adj             (Buffered(1))
                 + N * H * elt                 # li0             (Buffered(1))
                 + N * H * 4                   # alpha*h0 (f32)  (Buffered(1))
                 + 2 * H * H * elt             # per-layer weight (pipelined x2)
                 + 2 * N * H * 4               # output block (assume 2 buffers)
                 + N * H * elt)                # layer_inner scratch
    if vmem_need > vmem_budget:
        # TODO(synk): K-tiled adj @ layer_inner path for graphs beyond VMEM.
        raise ValueError(
            f"graph needs ~{vmem_need / 2**20:.1f} MiB VMEM; budget is "
            f"{vmem_budget / 2**20:.1f} MiB on this TPU generation")
    vmem_limit = int(min(vmem_cap, max(vmem_need + (8 << 20), 32 << 20)))

    flops = L * (2 * N * N * H + 2 * N * H * H)
    bytes_accessed = int((adj_c.size + li0.size + w_scaled.size) * elt
                         + h0s.size * 4 + N * H * 4 + L * 4)

    return pl.pallas_call(
        _gcnii_layers_kernel,
        out_shape=jax.ShapeDtypeStruct((N, H), jnp.float32),
        grid_spec=pltpu.PrefetchScalarGridSpec(
            num_scalar_prefetch=1,                 # one_minus_theta -> SMEM
            grid=(L,),
            in_specs=[
                # layer-invariant operands: single VMEM buffer, DMA'd once
                pl.BlockSpec((N, N), lambda l, omt: (0, 0),
                             pipeline_mode=pl.Buffered(1)),     # (1-alpha)*adj
                pl.BlockSpec((N, H), lambda l, omt: (0, 0),
                             pipeline_mode=pl.Buffered(1)),     # li0 (bf16)
                pl.BlockSpec((N, H), lambda l, omt: (0, 0),
                             pipeline_mode=pl.Buffered(1)),     # alpha*h0 (f32)
                # per-layer weight: pipelined (prefetched) across the layer axis
                pl.BlockSpec((pl.Squeezed(), H, H),
                             lambda l, omt: (l, 0, 0)),         # theta_l * W_l
            ],
            out_specs=pl.BlockSpec((N, H), lambda l, omt: (0, 0)),
            scratch_shapes=[pltpu.VMEM((N, H), cdt)],           # layer_inner
        ),
        compiler_params=pltpu.CompilerParams(
            dimension_semantics=("arbitrary",),    # layers are sequential
            vmem_limit_bytes=vmem_limit,
        ),
        cost_estimate=pl.CostEstimate(flops=flops, transcendentals=0,
                                      bytes_accessed=bytes_accessed),
    )(one_minus_theta, adj_c, li0, h0s, w_scaled)


# ---------------------------------------------------------------- module ----

class GCNIIPallas:
    """GCNII forward (eval mode: dropout is identity)."""

    def __init__(self, nfeat, nlayers, nhidden, dropout, lamda, alpha, key,
                 compute_dtype=jnp.bfloat16):
        self.nlayers = nlayers
        self.lamda = lamda
        self.alpha = alpha
        self.compute_dtype = compute_dtype
        # TODO(synk): dropout implemented as identity (training=False semantics).
        self.dropout = dropout

        k_fc, k_b, *k_convs = jax.random.split(key, 2 + nlayers)
        # Initial fc: Linear(nfeat, nhidden). (GCNII.forward uses self.fcs[0],
        # which the reference __init__ never creates; it is created here.)
        bound = 1.0 / math.sqrt(nfeat)
        self.fc_w = jax.random.uniform(k_fc, (nfeat, nhidden), jnp.float32,
                                       -bound, bound)
        self.fc_b = jax.random.uniform(k_b, (nhidden,), jnp.float32,
                                       -bound, bound)
        # GraphConvolution weights: uniform(-stdv, stdv), stdv = 1/sqrt(nhidden)
        stdv = 1.0 / math.sqrt(nhidden)
        self.conv_w = jnp.stack(
            [jax.random.uniform(k, (nhidden, nhidden), jnp.float32, -stdv, stdv)
             for k in k_convs])
        self.thetas = [math.log(lamda / (l + 1) + 1.0) for l in range(nlayers)]

    def __call__(self, x, adj):
        return gcnii_forward(x, adj, self.fc_w, self.fc_b, self.conv_w,
                             self.thetas, alpha=self.alpha,
                             compute_dtype=self.compute_dtype)

    # pure-JAX f32 reference (original, un-folded formulation) for validation
    def reference(self, x, adj):
        li = jnp.maximum(x @ self.fc_w + self.fc_b, 0.0)
        h0 = li
        for i in range(self.nlayers):
            theta = self.thetas[i]
            w = self.conv_w[i]
            hi = adj @ li
            support = (1.0 - self.alpha) * hi + self.alpha * h0
            li = jnp.maximum(theta * (support @ w) + (1.0 - theta) * support,
                             0.0)
        return li


# ------------------------------------------------------------------- main ---

if __name__ == "__main__":
    key = jax.random.PRNGKey(0)
    k_param, k_x, k_adj = jax.random.split(key, 3)

    # Lane-dense, small shapes: feature dims multiples of 128, node count a
    # multiple of 8.  (Note: this is overhead-dominated; benchmark at real N.)
    N_NODES = 256
    NFEAT = 128
    NHIDDEN = 128
    NLAYERS = 4

    model = GCNIIPallas(nfeat=NFEAT, nlayers=NLAYERS, nhidden=NHIDDEN,
                        dropout=0.5, lamda=0.5, alpha=0.1, key=k_param)

    x = jax.random.normal(k_x, (N_NODES, NFEAT), jnp.float32)
    # symmetric row-normalized adjacency-like matrix
    a = jax.random.uniform(k_adj, (N_NODES, N_NODES), jnp.float32)
    a = (a + a.T) * 0.5
    adj = a / jnp.sum(a, axis=-1, keepdims=True)

    out = jax.block_until_ready(model(x, adj))
    ref = model.reference(x, adj)

    assert out.shape == (N_NODES, NHIDDEN)
    assert jnp.allclose(out, ref, rtol=3e-2, atol=3e-2), "mismatch vs reference"

    print("KERNEL_OK")
</pallas_src>

<mosaic_0001>
module attributes {stable_mosaic.version = 11 : i64} {
  func.func @_fc0_kernel(%arg0: memref<256x128xbf16, #tpu.memory_space<vmem>>, %arg1: memref<128x128xbf16, #tpu.memory_space<vmem>>, %arg2: memref<1x128xf32, #tpu.memory_space<vmem>>, %arg3: memref<256x128xbf16, #tpu.memory_space<vmem>>, %arg4: memref<256x128xf32, #tpu.memory_space<vmem>>) attributes {dimension_semantics = [], scalar_prefetch = 0 : i64, scratch_operands = 0 : i64, tpu.core_type = #tpu.core_type<tc>} {
    %c0 = arith.constant 0 : index
    %c0_0 = arith.constant 0 : index
    %0 = vector.load %arg0[%c0, %c0_0] : memref<256x128xbf16, #tpu.memory_space<vmem>>, vector<256x128xbf16>
    %c0_1 = arith.constant 0 : index
    %c0_2 = arith.constant 0 : index
    %1 = vector.load %arg1[%c0_1, %c0_2] : memref<128x128xbf16, #tpu.memory_space<vmem>>, vector<128x128xbf16>
    %cst = arith.constant dense<0.000000e+00> : vector<256x128xf32>
    %2 = tpu.matmul %0, %1, %cst {dimension_numbers = #tpu.dot_dimension_numbers<[1], [0], [0], [1], [0, 0, 1, 1], [], []>} : vector<256x128xbf16>, vector<128x128xbf16>, vector<256x128xf32> -> vector<256x128xf32>
    %c0_3 = arith.constant 0 : index
    %c0_4 = arith.constant 0 : index
    %3 = vector.load %arg2[%c0_3, %c0_4] : memref<1x128xf32, #tpu.memory_space<vmem>>, vector<1x128xf32>
    %4 = vector.broadcast %3 : vector<1x128xf32> to vector<256x128xf32>
    %5 = arith.addf %2, %4 : vector<256x128xf32>
    %cst_5 = arith.constant 0.000000e+00 : f32
    %6 = vector.broadcast %cst_5 : f32 to vector<256x128xf32>
    %7 = arith.maximumf %5, %6 : vector<256x128xf32>
    %8 = arith.truncf %7 : vector<256x128xf32> to vector<256x128xbf16>
    %c0_6 = arith.constant 0 : index
    %c0_7 = arith.constant 0 : index
    %9 = vector.load %arg3[%c0_6, %c0_7] : memref<256x128xbf16, #tpu.memory_space<vmem>>, vector<256x128xbf16>
    tpu.vector_store %arg3[%c0_6, %c0_7], %8 {strides = array<i32>} : memref<256x128xbf16, #tpu.memory_space<vmem>>, vector<256x128xbf16>,
    %cst_8 = arith.constant 1.000000e-01 : f32
    %10 = vector.broadcast %cst_8 : f32 to vector<256x128xf32>
    %11 = arith.mulf %10, %7 : vector<256x128xf32>
    %c0_9 = arith.constant 0 : index
    %c0_10 = arith.constant 0 : index
    %12 = vector.load %arg4[%c0_9, %c0_10] : memref<256x128xf32, #tpu.memory_space<vmem>>, vector<256x128xf32>
    tpu.vector_store %arg4[%c0_9, %c0_10], %11 {strides = array<i32>} : memref<256x128xf32, #tpu.memory_space<vmem>>, vector<256x128xf32>,
    return
  }
}

</mosaic_0001>

<llo_original>
// kernel: tpu_custom_call.1
$region0: #{tpu_custom_call.1}
  #allocation0 [shape = 'u32[]', space=smem, size = 0x4, offset = 0x4, fixed_abs, tag = 'smem constant byte address 0x4 - core index']
  #allocation1 [shape = 'u32[144,128]{1,0:T(1,128)}', space=vmem, size = 0x12000, scoped, tag = 'internal scratch']
  %s0 = inlined_call_operand.hbm [shape: bf16[256,128], index: 0, kind: input, shape index: {}]
  %s1 = inlined_call_operand.hbm [shape: bf16[128,128], index: 1, kind: input, shape index: {}]
  %s2 = inlined_call_operand.vmem [shape: f32[1,128], index: 2, kind: input, shape index: {}]
  %s3 = inlined_call_operand.hbm [shape: bf16[256,128], index: 3, kind: output, shape index: {0}]
  %s4 = inlined_call_operand.hbm [shape: f32[256,128], index: 4, kind: output, shape index: {1}]
  %5 = xla_tuple %s3, %s4
  %s6 = sld [smem:[#allocation0]]
  $region38: #{tpu_custom_call.1} parent=0
    _
  %s8 = ssub.s32 1, %s6
  %s9 = scalar_select 0, %s8, %s6
  $region1: #{tpu_custom_call.1} parent=0
    #allocation2 [shape = 'u8[65536]{0}', space=vmem, size = 0x10000, scoped, tag = 'input window, operand 0, single buffered']
    #allocation3 [shape = 's32[1]{0}', space=sflag, size = 0x4, scoped, tag = 'scoped memory for tpu_custom_call.1']
    #allocation4 [shape = 's32[1]{0}', space=sflag, size = 0x4, scoped, tag = 'scoped memory for tpu_custom_call.1']
    #allocation5 [shape = 'u8[32768]{0}', space=vmem, size = 0x8000, scoped, tag = 'input window, operand 1, single buffered']
    #allocation6 [shape = 's32[1]{0}', space=sflag, size = 0x4, scoped, tag = 'scoped memory for tpu_custom_call.1']
    #allocation7 [shape = 'u8[65536]{0}', space=vmem, size = 0x10000, scoped, tag = 'output window, operand 0, single buffered']
    #allocation8 [shape = 'u8[131072]{0}', space=vmem, size = 0x20000, scoped, tag = 'output window, operand 1, single buffered']
    #allocation9 [shape = 's32[1]{0}', space=sflag, size = 0x4, scoped, tag = 'scoped memory for tpu_custom_call.1']
    %10 = vsyncpa [#allocation3], 0
    %11 = vsyncpa [#allocation6], 0
    %12 = vsyncpa [#allocation4], 0
    %13 = vsyncpa [#allocation9], 0
    // Predicated region
    $region2: #{tpu_custom_call.1} parent=1 // pred_check
      _
    $region3: #{tpu_custom_call.1} parent=1 // pred_check_branch
      %15 = sbr.rel (0) target = $region5
    $region4: #{tpu_custom_call.1} parent=1 // pred_region
      %s17 = ssub.s32 2048, 2048
      %18 = vsyncadd [#allocation3], %s17
      %s19 = sshll.u32 [#allocation2], 4
      %s20 = int_to_ptr.vmem [resolvable:$true] %s19
      %25 = dma.hbm_to_vmem [thread:$0]  %s0, 2048, %s20, [#allocation3], 64, 64, 4
    $region5: #{tpu_custom_call.1} parent=1 // pred_fallthru
      _
    // Predicated region
    $region6: #{tpu_custom_call.1} parent=1 // pred_check
      _
    $region7: #{tpu_custom_call.1} parent=1 // pred_check_branch
      %27 = sbr.rel (0) target = $region9
    $region8: #{tpu_custom_call.1} parent=1 // pred_region
      %s29 = ssub.s32 1024, 1024
      %30 = vsyncadd [#allocation6], %s29
      %s31 = sshll.u32 [#allocation5], 4
      %s32 = int_to_ptr.vmem [resolvable:$true] %s31
      %37 = dma.hbm_to_vmem [thread:$0]  %s1, 1024, %s32, [#allocation6], 64, 64, 4
    $region9: #{tpu_custom_call.1} parent=1 // pred_fallthru
      _
    // Predicated region
    $region10: #{tpu_custom_call.1} parent=1 // pred_check
      _
    $region11: #{tpu_custom_call.1} parent=1 // pred_check_branch
      %39 = sbr.rel (0) target = $region13
    $region12: #{tpu_custom_call.1} parent=1 // pred_region
      _
    $region13: #{tpu_custom_call.1} parent=1 // pred_fallthru
      _
    // Predicated region
    $region14: #{tpu_custom_call.1} parent=1 // pred_check
      _
    $region15: #{tpu_custom_call.1} parent=1 // pred_check_branch
      %41 = sbr.rel (0) target = $region17
    $region16: #{tpu_custom_call.1} parent=1 // pred_region
      %42 = dma.done [#allocation3], 2048
    $region17: #{tpu_custom_call.1} parent=1 // pred_fallthru
      _
    // Predicated region
    $region18: #{tpu_custom_call.1} parent=1 // pred_check
      _
    $region19: #{tpu_custom_call.1} parent=1 // pred_check_branch
      %44 = sbr.rel (0) target = $region21
    $region20: #{tpu_custom_call.1} parent=1 // pred_region
      %45 = dma.done [#allocation6], 1024
    $region21: #{tpu_custom_call.1} parent=1 // pred_fallthru
      _
    %v47 = vld [vmem:[#allocation2] sm:$0xf]
    %v48 = vld [vmem:[#allocation2 + $0x4] sm:$0xf]
    %v49 = vld [vmem:[#allocation2 + $0x8] sm:$0xf]
    %v50 = vld [vmem:[#allocation2 + $0xc] sm:$0xf]
    %v51 = vld [vmem:[#allocation2 + $0x10] sm:$0xf]
    %v52 = vld [vmem:[#allocation2 + $0x14] sm:$0xf]
    %v53 = vld [vmem:[#allocation2 + $0x18] sm:$0xf]
    %v54 = vld [vmem:[#allocation2 + $0x1c] sm:$0xf]
    %v55 = vld [vmem:[#allocation2 + $0x20] sm:$0xf]
    %v56 = vld [vmem:[#allocation2 + $0x24] sm:$0xf]
    %v57 = vld [vmem:[#allocation2 + $0x28] sm:$0xf]
    %v58 = vld [vmem:[#allocation2 + $0x2c] sm:$0xf]
    %v59 = vld [vmem:[#allocation2 + $0x30] sm:$0xf]
    %v60 = vld [vmem:[#allocation2 + $0x34] sm:$0xf]
    %v61 = vld [vmem:[#allocation2 + $0x38] sm:$0xf]
    %v62 = vld [vmem:[#allocation2 + $0x3c] sm:$0xf]
    %v63 = vld [vmem:[#allocation2 + $0x40] sm:$0xf]
    %v64 = vld [vmem:[#allocation2 + $0x44] sm:$0xf]
    %v65 = vld [vmem:[#allocation2 + $0x48] sm:$0xf]
    %v66 = vld [vmem:[#allocation2 + $0x4c] sm:$0xf]
    %v67 = vld [vmem:[#allocation2 + $0x50] sm:$0xf]
    %v68 = vld [vmem:[#allocation2 + $0x54] sm:$0xf]
    %v69 = vld [vmem:[#allocation2 + $0x58] sm:$0xf]
    %v70 = vld [vmem:[#allocation2 + $0x5c] sm:$0xf]
    %v71 = vld [vmem:[#allocation2 + $0x60] sm:$0xf]
    %v72 = vld [vmem:[#allocation2 + $0x64] sm:$0xf]
    %v73 = vld [vmem:[#allocation2 + $0x68] sm:$0xf]
    %v74 = vld [vmem:[#allocation2 + $0x6c] sm:$0xf]
    %v75 = vld [vmem:[#allocation2 + $0x70] sm:$0xf]
    %v76 = vld [vmem:[#allocation2 + $0x74] sm:$0xf]
    %v77 = vld [vmem:[#allocation2 + $0x78] sm:$0xf]
    %v78 = vld [vmem:[#allocation2 + $0x7c] sm:$0xf]
    %v79 = vld [vmem:[#allocation5] sm:$0xf]
    %v80 = vld [vmem:[#allocation5 + $0x4] sm:$0xf]
    %v81 = vld [vmem:[#allocation5 + $0x8] sm:$0xf]
    %v82 = vld [vmem:[#allocation5 + $0xc] sm:$0xf]
    %v83 = vld [vmem:[#allocation5 + $0x10] sm:$0xf]
    %v84 = vld [vmem:[#allocation5 + $0x14] sm:$0xf]
    %v85 = vld [vmem:[#allocation5 + $0x18] sm:$0xf]
    %v86 = vld [vmem:[#allocation5 + $0x1c] sm:$0xf]
    %v87 = vld [vmem:[#allocation5 + $0x20] sm:$0xf]
    %v88 = vld [vmem:[#allocation5 + $0x24] sm:$0xf]
    %v89 = vld [vmem:[#allocation5 + $0x28] sm:$0xf]
    %v90 = vld [vmem:[#allocation5 + $0x2c] sm:$0xf]
    %v91 = vld [vmem:[#allocation5 + $0x30] sm:$0xf]
    %v92 = vld [vmem:[#allocation5 + $0x34] sm:$0xf]
    %v93 = vld [vmem:[#allocation5 + $0x38] sm:$0xf]
    %v94 = vld [vmem:[#allocation5 + $0x3c] sm:$0xf]
    %v95 = vld [vmem:[%s2] sm:$0x1]
    %v97 = vlaneseq
    %v98 = vshrl.u32 %v97, 7
    %v99 = vsub.s32 0, %v98
    %v100 = vrot.slane %v95, %v99
    %v134 = vunpack.c.l.b16 %v47
    %v135 = vunpack.c.l.b16 %v48
    %v136 = vunpack.c.l.b16 %v49
    %v137 = vunpack.c.l.b16 %v50
    %v138 = vunpack.c.l.b16 %v51
    %v139 = vunpack.c.l.b16 %v52
    %v140 = vunpack.c.l.b16 %v53
    %v141 = vunpack.c.l.b16 %v54
    %v142 = vunpack.c.l.b16 %v55
    %v143 = vunpack.c.l.b16 %v56
    %v144 = vunpack.c.l.b16 %v57
    %v145 = vunpack.c.l.b16 %v58
    %v146 = vunpack.c.l.b16 %v59
    %v147 = vunpack.c.l.b16 %v60
    %v148 = vunpack.c.l.b16 %v61
    %v149 = vunpack.c.l.b16 %v62
    %v150 = vunpack.c.l.b16 %v63
    %v151 = vunpack.c.l.b16 %v64
    %v152 = vunpack.c.l.b16 %v65
    %v153 = vunpack.c.l.b16 %v66
    %v154 = vunpack.c.l.b16 %v67
    %v155 = vunpack.c.l.b16 %v68
    %v156 = vunpack.c.l.b16 %v69
    %v157 = vunpack.c.l.b16 %v70
    %v158 = vunpack.c.l.b16 %v71
    %v159 = vunpack.c.l.b16 %v72
    %v160 = vunpack.c.l.b16 %v73
    %v161 = vunpack.c.l.b16 %v74
    %v162 = vunpack.c.l.b16 %v75
    %v163 = vunpack.c.l.b16 %v76
    %v164 = vunpack.c.l.b16 %v77
    %v165 = vunpack.c.l.b16 %v78
    %v166 = vpack.c.b16 %v135, %v134
    %v167 = vpack.c.b16 %v137, %v136
    %v168 = vpack.c.b16 %v139, %v138
    %v169 = vpack.c.b16 %v141, %v140
    %v170 = vpack.c.b16 %v143, %v142
    %v171 = vpack.c.b16 %v145, %v144
    %v172 = vpack.c.b16 %v147, %v146
    %v173 = vpack.c.b16 %v149, %v148
    %v174 = vpack.c.b16 %v151, %v150
    %v175 = vpack.c.b16 %v153, %v152
    %v176 = vpack.c.b16 %v155, %v154
    %v177 = vpack.c.b16 %v157, %v156
    %v178 = vpack.c.b16 %v159, %v158
    %v179 = vpack.c.b16 %v161, %v160
    %v180 = vpack.c.b16 %v163, %v162
    %v181 = vpack.c.b16 %v165, %v164
    %v214 = vunpack.c.l.b16 %v79
    %v215 = vunpack.c.l.b16 %v80
    %v216 = vunpack.c.l.b16 %v81
    %v217 = vunpack.c.l.b16 %v82
    %v218 = vunpack.c.l.b16 %v83
    %v219 = vunpack.c.l.b16 %v84
    %v220 = vunpack.c.l.b16 %v85
    %v221 = vunpack.c.l.b16 %v86
    %v222 = vunpack.c.l.b16 %v87
    %v223 = vunpack.c.l.b16 %v88
    %v224 = vunpack.c.l.b16 %v89
    %v225 = vunpack.c.l.b16 %v90
    %v226 = vunpack.c.l.b16 %v91
    %v227 = vunpack.c.l.b16 %v92
    %v228 = vunpack.c.l.b16 %v93
    %v229 = vunpack.c.l.b16 %v94
    %v230 = vpack.c.b16 %v215, %v214
    %v231 = vpack.c.b16 %v217, %v216
    %v232 = vpack.c.b16 %v219, %v218
    %v233 = vpack.c.b16 %v221, %v220
    %v234 = vpack.c.b16 %v223, %v222
    %v235 = vpack.c.b16 %v225, %v224
    %v236 = vpack.c.b16 %v227, %v226
    %v237 = vpack.c.b16 %v229, %v228
    %246 = vmatprep.subr.bf16.mxu0 0
    %247 = vmatpush1.bf16.msra.mxu0 %v237
    %248 = vmatprep.subr.bf16.mxu0 0
    %249 = vmatpush1.bf16.msra.mxu0 %v236
    %250 = vmatprep.subr.bf16.mxu0 0
    %251 = vmatpush1.bf16.msra.mxu0 %v235
    %252 = vmatprep.subr.bf16.mxu0 0
    %253 = vmatpush1.bf16.msra.mxu0 %v234
    %254 = vmatprep.subr.bf16.mxu0 0
    %255 = vmatpush1.bf16.msra.mxu0 %v233
    %256 = vmatprep.subr.bf16.mxu0 0
    %257 = vmatpush1.bf16.msra.mxu0 %v232
    %258 = vmatprep.subr.bf16.mxu0 0
    %259 = vmatpush1.bf16.msra.mxu0 %v231
    %260 = vmatprep.subr.bf16.mxu0 0
    %261 = vmatpush1.bf16.msra.mxu0 %v230
    %262 = vmatprep.subr.bf16.mxu0 0
    %263 = vmatpush2.bf16.msra.mxu0 0
    %264 = vmatprep.subr.bf16.mxu0 0
    %265 = vmatpush2.bf16.msra.mxu0 0
    %266 = vmatprep.subr.bf16.mxu0 0
    %267 = vmatpush2.bf16.msra.mxu0 0
    %268 = vmatprep.subr.bf16.mxu0 0
    %269 = vmatpush2.bf16.msra.mxu0 0
    %270 = vmatprep.subr.bf16.mxu0 0
    %271 = vmatpush2.bf16.msra.mxu0 0
    %272 = vmatprep.subr.bf16.mxu0 0
    %273 = vmatpush2.bf16.msra.mxu0 0
    %274 = vmatprep.subr.bf16.mxu0 0
    %275 = vmatpush2.bf16.msra.mxu0 0
    %276 = vmatprep.subr.bf16.mxu0 0
    %277 = vmatpush2.bf16.msra.mxu0 0
    %278 = vmatprep.mubr.bf16.mxu0 0
    %279 = vmatmul.mubr.bf16.gmra.mxu0 %v166
    %v280 = vpop.f32.mrf.mxu0
    %v281 = vadd.f32 %v100, %v280
    %v282 = vpop.f32.mrf.mxu0
    %v283 = vpop.f32.mrf.mxu0
    %v284 = vadd.f32 %v100, %v283
    %v285 = vpop.f32.mrf.mxu0
    %286 = vmatprep.mubr.bf16.mxu0 0
    %287 = vmatmul.mubr.bf16.gmra.mxu0 %v167
    %v288 = vpop.f32.mrf.mxu0
    %v289 = vadd.f32 %v100, %v288
    %v290 = vpop.f32.mrf.mxu0
    %v291 = vpop.f32.mrf.mxu0
    %v292 = vadd.f32 %v100, %v291
    %v293 = vpop.f32.mrf.mxu0
    %294 = vmatprep.mubr.bf16.mxu0 0
    %295 = vmatmul.mubr.bf16.gmra.mxu0 %v168
    %v296 = vpop.f32.mrf.mxu0
    %v297 = vadd.f32 %v100, %v296
    %v298 = vpop.f32.mrf.mxu0
    %v299 = vpop.f32.mrf.mxu0
    %v300 = vadd.f32 %v100, %v299
    %v301 = vpop.f32.mrf.mxu0
    %302 = vmatprep.mubr.bf16.mxu0 0
    %303 = vmatmul.mubr.bf16.gmra.mxu0 %v169
    %v304 = vpop.f32.mrf.mxu0
    %v305 = vadd.f32 %v100, %v304
    %v306 = vpop.f32.mrf.mxu0
    %v307 = vpop.f32.mrf.mxu0
    %v308 = vadd.f32 %v100, %v307
    %v309 = vpop.f32.mrf.mxu0
    %310 = vmatprep.mubr.bf16.mxu0 0
    %311 = vmatmul.mubr.bf16.gmra.mxu0 %v170
    %v312 = vpop.f32.mrf.mxu0
    %v313 = vadd.f32 %v100, %v312
    %v314 = vpop.f32.mrf.mxu0
    %v315 = vpop.f32.mrf.mxu0
    %v316 = vadd.f32 %v100, %v315
    %v317 = vpop.f32.mrf.mxu0
    %318 = vmatprep.mubr.bf16.mxu0 0
    %319 = vmatmul.mubr.bf16.gmra.mxu0 %v171
    %v320 = vpop.f32.mrf.mxu0
    %v321 = vadd.f32 %v100, %v320
    %v322 = vpop.f32.mrf.mxu0
    %v323 = vpop.f32.mrf.mxu0
    %v324 = vadd.f32 %v100, %v323
    %v325 = vpop.f32.mrf.mxu0
    %326 = vmatprep.mubr.bf16.mxu0 0
    %327 = vmatmul.mubr.bf16.gmra.mxu0 %v172
    %v328 = vpop.f32.mrf.mxu0
    %v329 = vadd.f32 %v100, %v328
    %v330 = vpop.f32.mrf.mxu0
    %v331 = vpop.f32.mrf.mxu0
    %v332 = vadd.f32 %v100, %v331
    %v333 = vpop.f32.mrf.mxu0
    %334 = vmatprep.mubr.bf16.mxu0 0
    %335 = vmatmul.mubr.bf16.gmra.mxu0 %v173
    %v336 = vpop.f32.mrf.mxu0
    %v337 = vadd.f32 %v100, %v336
    %v338 = vpop.f32.mrf.mxu0
    %v339 = vpop.f32.mrf.mxu0
    %v340 = vadd.f32 %v100, %v339
    %v341 = vpop.f32.mrf.mxu0
    %342 = vmatprep.mubr.bf16.mxu0 0
    %343 = vmatmul.mubr.bf16.gmra.mxu0 %v174
    %v344 = vpop.f32.mrf.mxu0
    %v345 = vadd.f32 %v100, %v344
    %v346 = vpop.f32.mrf.mxu0
    %v347 = vpop.f32.mrf.mxu0
    %v348 = vadd.f32 %v100, %v347
    %v349 = vpop.f32.mrf.mxu0
    %350 = vmatprep.mubr.bf16.mxu0 0
    %351 = vmatmul.mubr.bf16.gmra.mxu0 %v175
    %v352 = vpop.f32.mrf.mxu0
    %v353 = vadd.f32 %v100, %v352
    %v354 = vpop.f32.mrf.mxu0
    %v355 = vpop.f32.mrf.mxu0
    %v356 = vadd.f32 %v100, %v355
    %v357 = vpop.f32.mrf.mxu0
    %358 = vmatprep.mubr.bf16.mxu0 0
    %359 = vmatmul.mubr.bf16.gmra.mxu0 %v176
    %v360 = vpop.f32.mrf.mxu0
    %v361 = vadd.f32 %v100, %v360
    %v362 = vpop.f32.mrf.mxu0
    %v363 = vpop.f32.mrf.mxu0
    %v364 = vadd.f32 %v100, %v363
    %v365 = vpop.f32.mrf.mxu0
    %366 = vmatprep.mubr.bf16.mxu0 0
    %367 = vmatmul.mubr.bf16.gmra.mxu0 %v177
    %v368 = vpop.f32.mrf.mxu0
    %v369 = vadd.f32 %v100, %v368
    %v370 = vpop.f32.mrf.mxu0
    %v371 = vpop.f32.mrf.mxu0
    %v372 = vadd.f32 %v100, %v371
    %v373 = vpop.f32.mrf.mxu0
    %374 = vmatprep.mubr.bf16.mxu0 0
    %375 = vmatmul.mubr.bf16.gmra.mxu0 %v178
    %v376 = vpop.f32.mrf.mxu0
    %v377 = vadd.f32 %v100, %v376
    %v378 = vpop.f32.mrf.mxu0
    %v379 = vpop.f32.mrf.mxu0
    %v380 = vadd.f32 %v100, %v379
    %v381 = vpop.f32.mrf.mxu0
    %382 = vmatprep.mubr.bf16.mxu0 0
    %383 = vmatmul.mubr.bf16.gmra.mxu0 %v179
    %v384 = vpop.f32.mrf.mxu0
    %v385 = vadd.f32 %v100, %v384
    %v386 = vpop.f32.mrf.mxu0
    %v387 = vpop.f32.mrf.mxu0
    %v388 = vadd.f32 %v100, %v387
    %v389 = vpop.f32.mrf.mxu0
    %390 = vmatprep.mubr.bf16.mxu0 0
    %391 = vmatmul.mubr.bf16.gmra.mxu0 %v180
    %v392 = vpop.f32.mrf.mxu0
    %v393 = vadd.f32 %v100, %v392
    %v394 = vpop.f32.mrf.mxu0
    %v395 = vpop.f32.mrf.mxu0
    %v396 = vadd.f32 %v100, %v395
    %v397 = vpop.f32.mrf.mxu0
    %398 = vmatprep.mubr.bf16.mxu0 0
    %399 = vmatmul.mubr.bf16.gmra.mxu0 %v181
    %v400 = vpop.f32.mrf.mxu0
    %v401 = vadd.f32 %v100, %v400
    %v402 = vpop.f32.mrf.mxu0
    %v403 = vpop.f32.mrf.mxu0
    %v404 = vadd.f32 %v100, %v403
    %v405 = vpop.f32.mrf.mxu0
    %406 = vdwg.mxu0
    %v407 = vmax.f32 %v281, 0.0
    %v408 = vmax.f32 %v284, 0.0
    %v409 = vmax.f32 %v289, 0.0
    %v410 = vmax.f32 %v292, 0.0
    %v411 = vmax.f32 %v297, 0.0
    %v412 = vmax.f32 %v300, 0.0
    %v413 = vmax.f32 %v305, 0.0
    %v414 = vmax.f32 %v308, 0.0
    %v415 = vmax.f32 %v313, 0.0
    %v416 = vmax.f32 %v316, 0.0
    %v417 = vmax.f32 %v321, 0.0
    %v418 = vmax.f32 %v324, 0.0
    %v419 = vmax.f32 %v329, 0.0
    %v420 = vmax.f32 %v332, 0.0
    %v421 = vmax.f32 %v337, 0.0
    %v422 = vmax.f32 %v340, 0.0
    %v423 = vmax.f32 %v345, 0.0
    %v424 = vmax.f32 %v348, 0.0
    %v425 = vmax.f32 %v353, 0.0
    %v426 = vmax.f32 %v356, 0.0
    %v427 = vmax.f32 %v361, 0.0
    %v428 = vmax.f32 %v364, 0.0
    %v429 = vmax.f32 %v369, 0.0
    %v430 = vmax.f32 %v372, 0.0
    %v431 = vmax.f32 %v377, 0.0
    %v432 = vmax.f32 %v380, 0.0
    %v433 = vmax.f32 %v385, 0.0
    %v434 = vmax.f32 %v388, 0.0
    %v435 = vmax.f32 %v393, 0.0
    %v436 = vmax.f32 %v396, 0.0
    %v437 = vmax.f32 %v401, 0.0
    %v438 = vmax.f32 %v404, 0.0
    %v439 = vpack.c.bf16 %v408, %v407
    %v440 = vpack.c.bf16 %v410, %v409
    %v441 = vpack.c.bf16 %v412, %v411
    %v442 = vpack.c.bf16 %v414, %v413
    %v443 = vpack.c.bf16 %v416, %v415
    %v444 = vpack.c.bf16 %v418, %v417
    %v445 = vpack.c.bf16 %v420, %v419
    %v446 = vpack.c.bf16 %v422, %v421
    %v447 = vpack.c.bf16 %v424, %v423
    %v448 = vpack.c.bf16 %v426, %v425
    %v449 = vpack.c.bf16 %v428, %v427
    %v450 = vpack.c.bf16 %v430, %v429
    %v451 = vpack.c.bf16 %v432, %v431
    %v452 = vpack.c.bf16 %v434, %v433
    %v453 = vpack.c.bf16 %v436, %v435
    %v454 = vpack.c.bf16 %v438, %v437
    %v471 = vunpack.c.l.b16 %v439
    %v472 = vunpack.c.h.b16 %v439
    %v473 = vunpack.c.l.b16 %v440
    %v474 = vunpack.c.h.b16 %v440
    %v475 = vunpack.c.l.b16 %v441
    %v476 = vunpack.c.h.b16 %v441
    %v477 = vunpack.c.l.b16 %v442
    %v478 = vunpack.c.h.b16 %v442
    %v479 = vunpack.c.l.b16 %v443
    %v480 = vunpack.c.h.b16 %v443
    %v481 = vunpack.c.l.b16 %v444
    %v482 = vunpack.c.h.b16 %v444
    %v483 = vunpack.c.l.b16 %v445
    %v484 = vunpack.c.h.b16 %v445
    %v485 = vunpack.c.l.b16 %v446
    %v486 = vunpack.c.h.b16 %v446
    %v487 = vunpack.c.l.b16 %v447
    %v488 = vunpack.c.h.b16 %v447
    %v489 = vunpack.c.l.b16 %v448
    %v490 = vunpack.c.h.b16 %v448
    %v491 = vunpack.c.l.b16 %v449
    %v492 = vunpack.c.h.b16 %v449
    %v493 = vunpack.c.l.b16 %v450
    %v494 = vunpack.c.h.b16 %v450
    %v495 = vunpack.c.l.b16 %v451
    %v496 = vunpack.c.h.b16 %v451
    %v497 = vunpack.c.l.b16 %v452
    %v498 = vunpack.c.h.b16 %v452
    %v499 = vunpack.c.l.b16 %v453
    %v500 = vunpack.c.h.b16 %v453
    %v501 = vunpack.c.l.b16 %v454
    %v502 = vunpack.c.h.b16 %v454
    %v503 = vpack.c.b16 %v471, %v471
    %v504 = vpack.c.b16 %v472, %v472
    %v505 = vpack.c.b16 %v473, %v473
    %v506 = vpack.c.b16 %v474, %v474
    %v507 = vpack.c.b16 %v475, %v475
    %v508 = vpack.c.b16 %v476, %v476
    %v509 = vpack.c.b16 %v477, %v477
    %v510 = vpack.c.b16 %v478, %v478
    %v511 = vpack.c.b16 %v479, %v479
    %v512 = vpack.c.b16 %v480, %v480
    %v513 = vpack.c.b16 %v481, %v481
    %v514 = vpack.c.b16 %v482, %v482
    %v515 = vpack.c.b16 %v483, %v483
    %v516 = vpack.c.b16 %v484, %v484
    %v517 = vpack.c.b16 %v485, %v485
    %v518 = vpack.c.b16 %v486, %v486
    %v519 = vpack.c.b16 %v487, %v487
    %v520 = vpack.c.b16 %v488, %v488
    %v521 = vpack.c.b16 %v489, %v489
    %v522 = vpack.c.b16 %v490, %v490
    %v523 = vpack.c.b16 %v491, %v491
    %v524 = vpack.c.b16 %v492, %v492
    %v525 = vpack.c.b16 %v493, %v493
    %v526 = vpack.c.b16 %v494, %v494
    %v527 = vpack.c.b16 %v495, %v495
    %v528 = vpack.c.b16 %v496, %v496
    %v529 = vpack.c.b16 %v497, %v497
    %v530 = vpack.c.b16 %v498, %v498
    %v531 = vpack.c.b16 %v499, %v499
    %v532 = vpack.c.b16 %v500, %v500
    %v533 = vpack.c.b16 %v501, %v501
    %v534 = vpack.c.b16 %v502, %v502
    %567 = vst [vmem:[#allocation7] sm:$0xf] %v503
    %568 = vst [vmem:[#allocation7 + $0x4] sm:$0xf] %v504
    %569 = vst [vmem:[#allocation7 + $0x8] sm:$0xf] %v505
    %570 = vst [vmem:[#allocation7 + $0xc] sm:$0xf] %v506
    %571 = vst [vmem:[#allocation7 + $0x10] sm:$0xf] %v507
    %572 = vst [vmem:[#allocation7 + $0x14] sm:$0xf] %v508
    %573 = vst [vmem:[#allocation7 + $0x18] sm:$0xf] %v509
    %574 = vst [vmem:[#allocation7 + $0x1c] sm:$0xf] %v510
    %575 = vst [vmem:[#allocation7 + $0x20] sm:$0xf] %v511
    %576 = vst [vmem:[#allocation7 + $0x24] sm:$0xf] %v512
    %577 = vst [vmem:[#allocation7 + $0x28] sm:$0xf] %v513
    %578 = vst [vmem:[#allocation7 + $0x2c] sm:$0xf] %v514
    %579 = vst [vmem:[#allocation7 + $0x30] sm:$0xf] %v515
    %580 = vst [vmem:[#allocation7 + $0x34] sm:$0xf] %v516
    %581 = vst [vmem:[#allocation7 + $0x38] sm:$0xf] %v517
    %582 = vst [vmem:[#allocation7 + $0x3c] sm:$0xf] %v518
    %583 = vst [vmem:[#allocation7 + $0x40] sm:$0xf] %v519
    %584 = vst [vmem:[#allocation7 + $0x44] sm:$0xf] %v520
    %585 = vst [vmem:[#allocation7 + $0x48] sm:$0xf] %v521
    %586 = vst [vmem:[#allocation7 + $0x4c] sm:$0xf] %v522
    %587 = vst [vmem:[#allocation7 + $0x50] sm:$0xf] %v523
    %588 = vst [vmem:[#allocation7 + $0x54] sm:$0xf] %v524
    %589 = vst [vmem:[#allocation7 + $0x58] sm:$0xf] %v525
    %590 = vst [vmem:[#allocation7 + $0x5c] sm:$0xf] %v526
    %591 = vst [vmem:[#allocation7 + $0x60] sm:$0xf] %v527
    %592 = vst [vmem:[#allocation7 + $0x64] sm:$0xf] %v528
    %593 = vst [vmem:[#allocation7 + $0x68] sm:$0xf] %v529
    %594 = vst [vmem:[#allocation7 + $0x6c] sm:$0xf] %v530
    %595 = vst [vmem:[#allocation7 + $0x70] sm:$0xf] %v531
    %596 = vst [vmem:[#allocation7 + $0x74] sm:$0xf] %v532
    %597 = vst [vmem:[#allocation7 + $0x78] sm:$0xf] %v533
    %598 = vst [vmem:[#allocation7 + $0x7c] sm:$0xf] %v534
    %v599 = vmul.f32 %v407, 0.1
    %v600 = vmul.f32 %v408, 0.1
    %v601 = vmul.f32 %v409, 0.1
    %v602 = vmul.f32 %v410, 0.1
    %v603 = vmul.f32 %v411, 0.1
    %v604 = vmul.f32 %v412, 0.1
    %v605 = vmul.f32 %v413, 0.1
    %v606 = vmul.f32 %v414, 0.1
    %v607 = vmul.f32 %v415, 0.1
    %v608 = vmul.f32 %v416, 0.1
    %v609 = vmul.f32 %v417, 0.1
    %v610 = vmul.f32 %v418, 0.1
    %v611 = vmul.f32 %v419, 0.1
    %v612 = vmul.f32 %v420, 0.1
    %v613 = vmul.f32 %v421, 0.1
    %v614 = vmul.f32 %v422, 0.1
    %v615 = vmul.f32 %v423, 0.1
    %v616 = vmul.f32 %v424, 0.1
    %v617 = vmul.f32 %v425, 0.1
    %v618 = vmul.f32 %v426, 0.1
    %v619 = vmul.f32 %v427, 0.1
    %v620 = vmul.f32 %v428, 0.1
    %v621 = vmul.f32 %v429, 0.1
    %v622 = vmul.f32 %v430, 0.1
    %v623 = vmul.f32 %v431, 0.1
    %v624 = vmul.f32 %v432, 0.1
    %v625 = vmul.f32 %v433, 0.1
    %v626 = vmul.f32 %v434, 0.1
    %v627 = vmul.f32 %v435, 0.1
    %v628 = vmul.f32 %v436, 0.1
    %v629 = vmul.f32 %v437, 0.1
    %v630 = vmul.f32 %v438, 0.1
    %631 = vst [vmem:[#allocation8] sm:$0xff] %v599
    %632 = vst [vmem:[#allocation8 + $0x8] sm:$0xff] %v600
    %633 = vst [vmem:[#allocation8 + $0x10] sm:$0xff] %v601
    %634 = vst [vmem:[#allocation8 + $0x18] sm:$0xff] %v602
    %635 = vst [vmem:[#allocation8 + $0x20] sm:$0xff] %v603
    %636 = vst [vmem:[#allocation8 + $0x28] sm:$0xff] %v604
    %637 = vst [vmem:[#allocation8 + $0x30] sm:$0xff] %v605
    %638 = vst [vmem:[#allocation8 + $0x38] sm:$0xff] %v606
    %639 = vst [vmem:[#allocation8 + $0x40] sm:$0xff] %v607
    %640 = vst [vmem:[#allocation8 + $0x48] sm:$0xff] %v608
    %641 = vst [vmem:[#allocation8 + $0x50] sm:$0xff] %v609
    %642 = vst [vmem:[#allocation8 + $0x58] sm:$0xff] %v610
    %643 = vst [vmem:[#allocation8 + $0x60] sm:$0xff] %v611
    %644 = vst [vmem:[#allocation8 + $0x68] sm:$0xff] %v612
    %645 = vst [vmem:[#allocation8 + $0x70] sm:$0xff] %v613
    %646 = vst [vmem:[#allocation8 + $0x78] sm:$0xff] %v614
    %647 = vst [vmem:[#allocation8 + $0x80] sm:$0xff] %v615
    %648 = vst [vmem:[#allocation8 + $0x88] sm:$0xff] %v616
    %649 = vst [vmem:[#allocation8 + $0x90] sm:$0xff] %v617
    %650 = vst [vmem:[#allocation8 + $0x98] sm:$0xff] %v618
    %651 = vst [vmem:[#allocation8 + $0xa0] sm:$0xff] %v619
    %652 = vst [vmem:[#allocation8 + $0xa8] sm:$0xff] %v620
    %653 = vst [vmem:[#allocation8 + $0xb0] sm:$0xff] %v621
    %654 = vst [vmem:[#allocation8 + $0xb8] sm:$0xff] %v622
    %655 = vst [vmem:[#allocation8 + $0xc0] sm:$0xff] %v623
    %656 = vst [vmem:[#allocation8 + $0xc8] sm:$0xff] %v624
    %657 = vst [vmem:[#allocation8 + $0xd0] sm:$0xff] %v625
    %658 = vst [vmem:[#allocation8 + $0xd8] sm:$0xff] %v626
    %659 = vst [vmem:[#allocation8 + $0xe0] sm:$0xff] %v627
    %660 = vst [vmem:[#allocation8 + $0xe8] sm:$0xff] %v628
    %661 = vst [vmem:[#allocation8 + $0xf0] sm:$0xff] %v629
    %662 = vst [vmem:[#allocation8 + $0xf8] sm:$0xff] %v630
    // Predicated region
    $region22: #{tpu_custom_call.1} parent=1 // pred_check
      _
    $region23: #{tpu_custom_call.1} parent=1 // pred_check_branch
      %664 = sbr.rel (0) target = $region25
    $region24: #{tpu_custom_call.1} parent=1 // pred_region
      %s666 = ssub.s32 2048, 2048
      %667 = vsyncadd [#allocation4], %s666
      %s668 = sshll.u32 [#allocation7], 4
      %s669 = int_to_ptr.vmem [resolvable:$true] %s668
      %674 = dma.vmem_to_hbm [thread:$0]  %s669, 2048, %s3, [#allocation4], 64, 64, 4
    $region25: #{tpu_custom_call.1} parent=1 // pred_fallthru
      _
    // Predicated region
    $region26: #{tpu_custom_call.1} parent=1 // pred_check
      _
    $region27: #{tpu_custom_call.1} parent=1 // pred_check_branch
      %676 = sbr.rel (0) target = $region29
    $region28: #{tpu_custom_call.1} parent=1 // pred_region
      %s678 = ssub.s32 4096, 4096
      %679 = vsyncadd [#allocation9], %s678
      %s680 = sshll.u32 [#allocation8], 4
      %s681 = int_to_ptr.vmem [resolvable:$true] %s680
      %686 = dma.vmem_to_hbm [thread:$0]  %s681, 4096, %s4, [#allocation9], 128, 128, 8
    $region29: #{tpu_custom_call.1} parent=1 // pred_fallthru
      _
    // Predicated region
    $region30: #{tpu_custom_call.1} parent=1 // pred_check
      _
    $region31: #{tpu_custom_call.1} parent=1 // pred_check_branch
      %688 = sbr.rel (0) target = $region33
    $region32: #{tpu_custom_call.1} parent=1 // pred_region
      %689 = dma.done [#allocation4], 2048
    $region33: #{tpu_custom_call.1} parent=1 // pred_fallthru
      _
    // Predicated region
    $region34: #{tpu_custom_call.1} parent=1 // pred_check
      _
    $region35: #{tpu_custom_call.1} parent=1 // pred_check_branch
      %691 = sbr.rel (0) target = $region37
    $region36: #{tpu_custom_call.1} parent=1 // pred_region
      %692 = dma.done [#allocation9], 4096
    $region37: #{tpu_custom_call.1} parent=1 // pred_fallthru
      _
    %693 = vsyncpa [#allocation3], 1
    %694 = vsyncpa [#allocation6], 1
    %695 = vsyncpa [#allocation4], 1
    %696 = vsyncpa [#allocation9], 1

</llo_original>
